<compile_context>
chip_gen: v7x
topology: tpu7x:2x2x1
jax: 0.10.0
libtpu: 0.0.40
codegen_flags: <defaults>
</compile_context>

<pallas_src>
import jax
import jax.numpy as jnp
from jax.experimental import pallas as pl
from jax.experimental.pallas import tpu as pltpu

_SUBLANE = 8  # f32 sublane count


def _round_up(n, m):
    return ((n + m - 1) // m) * m


def actor_net_kernel(x_ref, w1_ref, b1_ref, w2_ref, b2_ref, w3_ref, b3_ref,
                     o_ref):
    """Fused forward: relu(x@W1+b1) -> relu(.@W2+b2) -> tanh(.@W3+b3).

    Matmuls run in the weight dtype (bf16) on the MXU with f32 accumulation;
    bias add / ReLU / tanh stay in f32 (full-rate VPU/EUP on v5e, harmless on
    v6e/v7x).  The bf16 downcast is fused into each ReLU so the f32
    intermediates' live ranges end immediately.
    """
    x = x_ref[...].astype(w1_ref.dtype)

    h1 = jnp.dot(x, w1_ref[...], preferred_element_type=jnp.float32)
    h1 = jnp.maximum(h1 + b1_ref[...], 0.0).astype(w2_ref.dtype)

    h2 = jnp.dot(h1, w2_ref[...], preferred_element_type=jnp.float32)
    h2 = jnp.maximum(h2 + b2_ref[...], 0.0).astype(w3_ref.dtype)

    h3 = jnp.dot(h2, w3_ref[...], preferred_element_type=jnp.float32)
    o_ref[...] = jnp.tanh(h3 + b3_ref[...]).astype(o_ref.dtype)


def prepare_actor_net_params(params, compute_dtype=jnp.bfloat16):
    """One-time prep: cast weights to the MXU compute dtype, biases stay f32.

    Call once and reuse — keeps pad/cast work off the per-inference path.
    """
    return {
        "w1": params["w1"].astype(compute_dtype),
        "w2": params["w2"].astype(compute_dtype),
        "w3": params["w3"].astype(compute_dtype),
        "b1": params["b1"].reshape(1, -1).astype(jnp.float32),
        "b2": params["b2"].reshape(1, -1).astype(jnp.float32),
        "b3": params["b3"].reshape(1, -1).astype(jnp.float32),
    }


def actor_net_forward(x, kparams, *, block_b=512):
    """x: (B, n_obs) float32. kparams: output of prepare_actor_net_params."""
    w1, b1 = kparams["w1"], kparams["b1"]
    w2, b2 = kparams["w2"], kparams["b2"]
    w3, b3 = kparams["w3"], kparams["b3"]

    B, n_obs = x.shape
    hidden = w1.shape[1]
    n_action = w3.shape[1]

    # --- Even batch tiling -------------------------------------------------
    # Round the batch to the f32 sublane count, then split it into equal grid
    # steps.  Force >=2 steps when the batch allows so v7x's 2 TensorCores
    # both get work (near-free on single-TC v5e/v6e: ~0.35us/step overhead).
    Bp = _round_up(B, _SUBLANE)
    n_steps = pl.cdiv(Bp, block_b)
    if n_steps == 1 and Bp >= 2 * _SUBLANE:
        n_steps = 2
    TB = _round_up(pl.cdiv(Bp, n_steps), _SUBLANE)
    Bp = TB * n_steps

    if Bp != B:
        # Padded batch rows produce garbage (bias-path) outputs; sliced off
        # below.  Feature dim stays un-padded (full-dim blocks are legal).
        x = jnp.pad(x, ((0, Bp - B), (0, 0)))

    # --- VMEM budget: actual footprint + small headroom --------------------
    w_itemsize = jnp.dtype(w1.dtype).itemsize
    w_bytes = (n_obs * hidden + hidden * hidden + hidden * n_action) * w_itemsize
    b_bytes = (2 * hidden + n_action) * 4
    stream_bytes = 2 * TB * (n_obs + n_action) * 4        # double-buffered x/out
    inter_bytes = TB * hidden * (4 + 4 + 2 * w_itemsize)  # h1/h2 f32 + bf16 copies
    vmem_est = 2 * (w_bytes + b_bytes) + stream_bytes + inter_bytes
    vmem_limit = int(min(vmem_est + 8 * 1024 * 1024, 48 * 1024 * 1024))

    resident = lambda i: (0, 0)  # weights/biases: same block every grid step

    out = pl.pallas_call(
        actor_net_kernel,
        out_shape=jax.ShapeDtypeStruct((Bp, n_action), jnp.float32),
        grid=(n_steps,),
        in_specs=[
            pl.BlockSpec((TB, n_obs), lambda i: (i, 0)),     # streamed x (f32)
            pl.BlockSpec((n_obs, hidden), resident),         # W1 (resident)
            pl.BlockSpec((1, hidden), resident),             # b1
            pl.BlockSpec((hidden, hidden), resident),        # W2
            pl.BlockSpec((1, hidden), resident),             # b2
            pl.BlockSpec((hidden, n_action), resident),      # W3
            pl.BlockSpec((1, n_action), resident),           # b3
        ],
        out_specs=pl.BlockSpec((TB, n_action), lambda i: (i, 0)),
        compiler_params=pltpu.CompilerParams(
            dimension_semantics=("parallel",),               # megacore on v7x
            vmem_limit_bytes=vmem_limit,
        ),
    )(x, w1, b1, w2, b2, w3, b3)

    return out[:B] if Bp != B else out


def init_actor_net_params(key, n_obs, n_action, hidden_size):
    """Deterministic f32 init mirroring nn.Linear defaults + the lin3 override."""
    k1, k2, k3, k4, k5, k6 = jax.random.split(key, 6)

    bound1 = 1.0 / jnp.sqrt(jnp.float32(n_obs))
    bound2 = 1.0 / jnp.sqrt(jnp.float32(hidden_size))

    w1 = jax.random.uniform(k1, (n_obs, hidden_size), jnp.float32,
                            -bound1, bound1)
    b1 = jax.random.uniform(k2, (1, hidden_size), jnp.float32,
                            -bound1, bound1)
    w2 = jax.random.uniform(k3, (hidden_size, hidden_size), jnp.float32,
                            -bound2, bound2)
    b2 = jax.random.uniform(k4, (1, hidden_size), jnp.float32,
                            -bound2, bound2)
    # lin3: weight/bias overridden to U(-0.003, 0.003).
    w3 = jax.random.uniform(k5, (hidden_size, n_action), jnp.float32,
                            -0.003, 0.003)
    b3 = jax.random.uniform(k6, (1, n_action), jnp.float32, -0.003, 0.003)

    return {"w1": w1, "b1": b1, "w2": w2, "b2": b2, "w3": w3, "b3": b3}


def actor_net_ref(x, params):
    """Pure-JAX f32 reference for correctness checking."""
    h = jax.nn.relu(x @ params["w1"] + params["b1"])
    h = jax.nn.relu(h @ params["w2"] + params["b2"])
    return jnp.tanh(h @ params["w3"] + params["b3"])


if __name__ == "__main__":
    n_obs, n_action, hidden_size = 8, 4, 32

    key = jax.random.PRNGKey(0)
    k_param, k_x1, k_x2 = jax.random.split(key, 3)
    params = init_actor_net_params(k_param, n_obs, n_action, hidden_size)
    kparams = prepare_actor_net_params(params)   # one-time weight prep

    # Small batch (single grid step) — matches the module's spec shapes.
    x_small = jax.random.normal(k_x1, (2, n_obs), jnp.float32)
    out_small = jax.block_until_ready(actor_net_forward(x_small, kparams))
    ref_small = actor_net_ref(x_small, params)
    assert out_small.shape == (2, n_action), out_small.shape
    # bf16 matmul inputs -> loosened tolerance vs. the f32 reference.
    assert jnp.allclose(out_small, ref_small, atol=2e-2, rtol=2e-2), \
        "mismatch vs reference (small batch)"

    # Larger batch exercising the multi-step pipelined batch grid (TB=192, 2 steps).
    x_big = jax.random.normal(k_x2, (384, n_obs), jnp.float32)
    out_big = jax.block_until_ready(actor_net_forward(x_big, kparams))
    ref_big = actor_net_ref(x_big, params)
    assert out_big.shape == (384, n_action), out_big.shape
    assert jnp.allclose(out_big, ref_big, atol=2e-2, rtol=2e-2), \
        "mismatch vs reference (large batch)"

    print("KERNEL_OK")
</pallas_src>

<mosaic_0001>
module attributes {stable_mosaic.version = 11 : i64} {
  func.func @actor_net_kernel(%arg0: i32, %arg1: memref<8x8xf32, #tpu.memory_space<vmem>>, %arg2: memref<8x32xbf16, #tpu.memory_space<vmem>>, %arg3: memref<1x32xf32, #tpu.memory_space<vmem>>, %arg4: memref<32x32xbf16, #tpu.memory_space<vmem>>, %arg5: memref<1x32xf32, #tpu.memory_space<vmem>>, %arg6: memref<32x4xbf16, #tpu.memory_space<vmem>>, %arg7: memref<1x4xf32, #tpu.memory_space<vmem>>, %arg8: memref<8x4xf32, #tpu.memory_space<vmem>>) attributes {dimension_semantics = [#tpu.dimension_semantics<parallel>], iteration_bounds = array<i64: 1>, scalar_prefetch = 0 : i64, scratch_operands = 0 : i64, tpu.core_type = #tpu.core_type<tc>, window_params = [{transform_indices = @transform_0, window_bounds = array<i64: 8, 8>}, {pipeline_mode = #tpu.pipeline_mode<synchronous>, transform_indices = @transform_1, window_bounds = array<i64: 8, 32>}, {pipeline_mode = #tpu.pipeline_mode<synchronous>, transform_indices = @transform_2, window_bounds = array<i64: 1, 32>}, {pipeline_mode = #tpu.pipeline_mode<synchronous>, transform_indices = @transform_3, window_bounds = array<i64: 32, 32>}, {pipeline_mode = #tpu.pipeline_mode<synchronous>, transform_indices = @transform_4, window_bounds = array<i64: 1, 32>}, {pipeline_mode = #tpu.pipeline_mode<synchronous>, transform_indices = @transform_5, window_bounds = array<i64: 32, 4>}, {pipeline_mode = #tpu.pipeline_mode<synchronous>, transform_indices = @transform_6, window_bounds = array<i64: 1, 4>}, {transform_indices = @transform_7, window_bounds = array<i64: 8, 4>}]} {
    %c0 = arith.constant 0 : index
    %c0_0 = arith.constant 0 : index
    %0 = vector.load %arg1[%c0, %c0_0] : memref<8x8xf32, #tpu.memory_space<vmem>>, vector<8x8xf32>
    %1 = arith.truncf %0 : vector<8x8xf32> to vector<8x8xbf16>
    %c0_1 = arith.constant 0 : index
    %c0_2 = arith.constant 0 : index
    %2 = vector.load %arg2[%c0_1, %c0_2] : memref<8x32xbf16, #tpu.memory_space<vmem>>, vector<8x32xbf16>
    %cst = arith.constant dense<0.000000e+00> : vector<8x32xf32>
    %3 = tpu.matmul %1, %2, %cst {dimension_numbers = #tpu.dot_dimension_numbers<[1], [0], [0], [1], [0, 0, 1, 1], [], []>} : vector<8x8xbf16>, vector<8x32xbf16>, vector<8x32xf32> -> vector<8x32xf32>
    %c0_3 = arith.constant 0 : index
    %c0_4 = arith.constant 0 : index
    %4 = vector.load %arg3[%c0_3, %c0_4] : memref<1x32xf32, #tpu.memory_space<vmem>>, vector<1x32xf32>
    %5 = vector.broadcast %4 : vector<1x32xf32> to vector<8x32xf32>
    %6 = arith.addf %3, %5 : vector<8x32xf32>
    %cst_5 = arith.constant 0.000000e+00 : f32
    %7 = vector.broadcast %cst_5 : f32 to vector<8x32xf32>
    %8 = arith.maximumf %6, %7 : vector<8x32xf32>
    %9 = arith.truncf %8 : vector<8x32xf32> to vector<8x32xbf16>
    %c0_6 = arith.constant 0 : index
    %c0_7 = arith.constant 0 : index
    %10 = vector.load %arg4[%c0_6, %c0_7] : memref<32x32xbf16, #tpu.memory_space<vmem>>, vector<32x32xbf16>
    %cst_8 = arith.constant dense<0.000000e+00> : vector<8x32xf32>
    %11 = tpu.matmul %9, %10, %cst_8 {dimension_numbers = #tpu.dot_dimension_numbers<[1], [0], [0], [1], [0, 0, 1, 1], [], []>} : vector<8x32xbf16>, vector<32x32xbf16>, vector<8x32xf32> -> vector<8x32xf32>
    %c0_9 = arith.constant 0 : index
    %c0_10 = arith.constant 0 : index
    %12 = vector.load %arg5[%c0_9, %c0_10] : memref<1x32xf32, #tpu.memory_space<vmem>>, vector<1x32xf32>
    %13 = vector.broadcast %12 : vector<1x32xf32> to vector<8x32xf32>
    %14 = arith.addf %11, %13 : vector<8x32xf32>
    %cst_11 = arith.constant 0.000000e+00 : f32
    %15 = vector.broadcast %cst_11 : f32 to vector<8x32xf32>
    %16 = arith.maximumf %14, %15 : vector<8x32xf32>
    %17 = arith.truncf %16 : vector<8x32xf32> to vector<8x32xbf16>
    %c0_12 = arith.constant 0 : index
    %c0_13 = arith.constant 0 : index
    %18 = vector.load %arg6[%c0_12, %c0_13] : memref<32x4xbf16, #tpu.memory_space<vmem>>, vector<32x4xbf16>
    %cst_14 = arith.constant dense<0.000000e+00> : vector<8x4xf32>
    %19 = tpu.matmul %17, %18, %cst_14 {dimension_numbers = #tpu.dot_dimension_numbers<[1], [0], [0], [1], [0, 0, 1, 1], [], []>} : vector<8x32xbf16>, vector<32x4xbf16>, vector<8x4xf32> -> vector<8x4xf32>
    %c0_15 = arith.constant 0 : index
    %c0_16 = arith.constant 0 : index
    %20 = vector.load %arg7[%c0_15, %c0_16] : memref<1x4xf32, #tpu.memory_space<vmem>>, vector<1x4xf32>
    %21 = vector.broadcast %20 : vector<1x4xf32> to vector<8x4xf32>
    %22 = arith.addf %19, %21 : vector<8x4xf32>
    %23 = math.tanh %22 : vector<8x4xf32>
    %c0_17 = arith.constant 0 : index
    %c0_18 = arith.constant 0 : index
    %24 = vector.load %arg8[%c0_17, %c0_18] : memref<8x4xf32, #tpu.memory_space<vmem>>, vector<8x4xf32>
    tpu.vector_store %arg8[%c0_17, %c0_18], %23 {strides = array<i32>} : memref<8x4xf32, #tpu.memory_space<vmem>>, vector<8x4xf32>,
    return
  }
  func.func @transform_0(%arg0: i32) -> (i32, i32) {
    %c0_i32 = arith.constant 0 : i32
    %c0_i32_0 = arith.constant 0 : i32
    return %arg0, %c0_i32 : i32, i32
  }
  func.func @transform_1(%arg0: i32) -> (i32, i32) {
    %c0_i32 = arith.constant 0 : i32
    %c0_i32_0 = arith.constant 0 : i32
    %c0_i32_1 = arith.constant 0 : i32
    return %c0_i32, %c0_i32_0 : i32, i32
  }
  func.func @transform_2(%arg0: i32) -> (i32, i32) {
    %c0_i32 = arith.constant 0 : i32
    %c0_i32_0 = arith.constant 0 : i32
    %c0_i32_1 = arith.constant 0 : i32
    return %c0_i32, %c0_i32_0 : i32, i32
  }
  func.func @transform_3(%arg0: i32) -> (i32, i32) {
    %c0_i32 = arith.constant 0 : i32
    %c0_i32_0 = arith.constant 0 : i32
    %c0_i32_1 = arith.constant 0 : i32
    return %c0_i32, %c0_i32_0 : i32, i32
  }
  func.func @transform_4(%arg0: i32) -> (i32, i32) {
    %c0_i32 = arith.constant 0 : i32
    %c0_i32_0 = arith.constant 0 : i32
    %c0_i32_1 = arith.constant 0 : i32
    return %c0_i32, %c0_i32_0 : i32, i32
  }
  func.func @transform_5(%arg0: i32) -> (i32, i32) {
    %c0_i32 = arith.constant 0 : i32
    %c0_i32_0 = arith.constant 0 : i32
    %c0_i32_1 = arith.constant 0 : i32
    return %c0_i32, %c0_i32_0 : i32, i32
  }
  func.func @transform_6(%arg0: i32) -> (i32, i32) {
    %c0_i32 = arith.constant 0 : i32
    %c0_i32_0 = arith.constant 0 : i32
    %c0_i32_1 = arith.constant 0 : i32
    return %c0_i32, %c0_i32_0 : i32, i32
  }
  func.func @transform_7(%arg0: i32) -> (i32, i32) {
    %c0_i32 = arith.constant 0 : i32
    %c0_i32_0 = arith.constant 0 : i32
    return %arg0, %c0_i32 : i32, i32
  }
}

</mosaic_0001>

<llo_original>
// kernel: tpu_custom_call.1
$region0: #{tpu_custom_call.1}
  #allocation0 [shape = 'u32[]', space=smem, size = 0x4, offset = 0x4, fixed_abs, tag = 'smem constant byte address 0x4 - core index']
  #allocation1 [shape = 'u32[144,128]{1,0:T(1,128)}', space=vmem, size = 0x12000, scoped, tag = 'internal scratch']
  %s0 = inlined_call_operand.vmem [shape: f32[8,8], index: 0, kind: input, shape index: {}]
  %s1 = inlined_call_operand.vmem [shape: bf16[8,32], index: 1, kind: input, shape index: {}]
  %s2 = inlined_call_operand.vmem [shape: f32[1,32], index: 2, kind: input, shape index: {}]
  %s3 = inlined_call_operand.vmem [shape: bf16[32,32], index: 3, kind: input, shape index: {}]
  %s4 = inlined_call_operand.vmem [shape: f32[1,32], index: 4, kind: input, shape index: {}]
  %s5 = inlined_call_operand.vmem [shape: bf16[32,4], index: 5, kind: input, shape index: {}]
  %s6 = inlined_call_operand.vmem [shape: f32[1,4], index: 6, kind: input, shape index: {}]
  %s7 = inlined_call_operand.vmem [shape: f32[8,4], index: 7, kind: output, shape index: {}]
  %s8 = sld [smem:[#allocation0]]
  $region38: #{tpu_custom_call.1} parent=0
    _
  %s10 = ssub.s32 1, %s8
  %s11 = scalar_select 0, %s10, %s8
  // Predicated region
  $region2: #{tpu_custom_call.1} parent=0 // pred_check
    _
  $region3: #{tpu_custom_call.1} parent=0 // pred_check_branch
    %13 = sbr.rel (0) target = $region5
  $region4: #{tpu_custom_call.1} parent=0 // pred_region
    _
  $region5: #{tpu_custom_call.1} parent=0 // pred_fallthru
    _
  // Predicated region
  $region6: #{tpu_custom_call.1} parent=0 // pred_check
    _
  $region7: #{tpu_custom_call.1} parent=0 // pred_check_branch
    %15 = sbr.rel (0) target = $region9
  $region8: #{tpu_custom_call.1} parent=0 // pred_region
    _
  $region9: #{tpu_custom_call.1} parent=0 // pred_fallthru
    _
  // Predicated region
  $region10: #{tpu_custom_call.1} parent=0 // pred_check
    _
  $region11: #{tpu_custom_call.1} parent=0 // pred_check_branch
    %17 = sbr.rel (0) target = $region13
  $region12: #{tpu_custom_call.1} parent=0 // pred_region
    _
  $region13: #{tpu_custom_call.1} parent=0 // pred_fallthru
    _
  // Predicated region
  $region14: #{tpu_custom_call.1} parent=0 // pred_check
    _
  $region15: #{tpu_custom_call.1} parent=0 // pred_check_branch
    %19 = sbr.rel (0) target = $region17
  $region16: #{tpu_custom_call.1} parent=0 // pred_region
    _
  $region17: #{tpu_custom_call.1} parent=0 // pred_fallthru
    _
  // Predicated region
  $region18: #{tpu_custom_call.1} parent=0 // pred_check
    _
  $region19: #{tpu_custom_call.1} parent=0 // pred_check_branch
    %21 = sbr.rel (0) target = $region21
  $region20: #{tpu_custom_call.1} parent=0 // pred_region
    _
  $region21: #{tpu_custom_call.1} parent=0 // pred_fallthru
    _
  // Predicated region
  $region22: #{tpu_custom_call.1} parent=0 // pred_check
    _
  $region23: #{tpu_custom_call.1} parent=0 // pred_check_branch
    %23 = sbr.rel (0) target = $region25
  $region24: #{tpu_custom_call.1} parent=0 // pred_region
    _
  $region25: #{tpu_custom_call.1} parent=0 // pred_fallthru
    _
  // Predicated region
  $region26: #{tpu_custom_call.1} parent=0 // pred_check
    _
  $region27: #{tpu_custom_call.1} parent=0 // pred_check_branch
    %25 = sbr.rel (0) target = $region29
  $region28: #{tpu_custom_call.1} parent=0 // pred_region
    _
  $region29: #{tpu_custom_call.1} parent=0 // pred_fallthru
    _
  %v27 = vld [vmem:[%s0] sm:$0xff]
  %v28 = vpack.c.bf16 %v27, %v27
  %v29 = vld [vmem:[%s1] sm:$0xf]
  %v30 = vld [vmem:[%s2] sm:$0x1]
  %v32 = vlaneseq
  %v33 = vshrl.u32 %v32, 7
  %v34 = vsub.s32 0, %v33
  %v35 = vrot.slane %v30, %v34
  %vm37 = vcmask 64512
  %v39 = vsel %vm37, %v28, 0
  %vm41 = vcmask 1043456
  %v43 = vsel %vm41, %v29, 0
  %45 = vmatprep.subr.bf16.mxu0 0
  %46 = vmatpush1.bf16.msra.mxu0 %v43
  %47 = vmatprep.subr.bf16.mxu0 0
  %48 = vmatpush1.bf16.msra.mxu0 0
  %49 = vmatprep.subr.bf16.mxu0 0
  %50 = vmatpush1.bf16.msra.mxu0 0
  %51 = vmatprep.subr.bf16.mxu0 0
  %52 = vmatpush1.bf16.msra.mxu0 0
  %53 = vmatprep.subr.bf16.mxu0 0
  %54 = vmatpush1.bf16.msra.mxu0 0
  %55 = vmatprep.subr.bf16.mxu0 0
  %56 = vmatpush1.bf16.msra.mxu0 0
  %57 = vmatprep.subr.bf16.mxu0 0
  %58 = vmatpush1.bf16.msra.mxu0 0
  %59 = vmatprep.subr.bf16.mxu0 0
  %60 = vmatpush1.bf16.msra.mxu0 0
  %61 = vmatprep.subr.bf16.mxu0 0
  %62 = vmatpush1.bf16.msra.mxu0 0
  %63 = vmatprep.subr.bf16.mxu0 0
  %64 = vmatpush1.bf16.msra.mxu0 0
  %65 = vmatprep.subr.bf16.mxu0 0
  %66 = vmatpush1.bf16.msra.mxu0 0
  %67 = vmatprep.subr.bf16.mxu0 0
  %68 = vmatpush1.bf16.msra.mxu0 0
  %69 = vmatprep.subr.bf16.mxu0 0
  %70 = vmatpush1.bf16.msra.mxu0 0
  %71 = vmatprep.subr.bf16.mxu0 0
  %72 = vmatpush1.bf16.msra.mxu0 0
  %73 = vmatprep.subr.bf16.mxu0 0
  %74 = vmatpush1.bf16.msra.mxu0 0
  %75 = vmatprep.subr.bf16.mxu0 0
  %76 = vmatpush1.bf16.msra.mxu0 0
  %77 = vmatprep.mubr.bf16.mxu0 0
  %78 = vmatmul.mubr.bf16.gmra.mrb[0].mxu0 %v39
  %v79 = vpop.f32.mrb[0].mxu0
  %v80 = vadd.f32 %v35, %v79
  %v81 = vpop.f32.mrb[0].mxu0
  %v82 = vpop.f32.mrb[0].mxu0
  %v83 = vpop.f32.mrb[0].mxu0
  %84 = vdwg.mxu0
  %v85 = vmax.f32 %v80, 0.0
  %v86 = vpack.c.bf16 %v85, %v85
  %v87 = vld [vmem:[%s3] sm:$0xf]
  %v88 = vld [vmem:[%s3 + $0x4] sm:$0xf]
  %v89 = vld [vmem:[%s3 + $0x8] sm:$0xf]
  %v90 = vld [vmem:[%s3 + $0xc] sm:$0xf]
  %v91 = vld [vmem:[%s4] sm:$0x1]
  %v93 = vlaneseq
  %v94 = vshrl.u32 %v93, 7
  %v95 = vsub.s32 0, %v94
  %v96 = vrot.slane %v91, %v95
  %v102 = vunpack.c.l.b16 %v87
  %v103 = vunpack.c.l.b16 %v88
  %v104 = vunpack.c.l.b16 %v89
  %v105 = vunpack.c.l.b16 %v90
  %v106 = vpack.c.b16 %v103, %v102
  %v107 = vpack.c.b16 %v105, %v104
  %vm110 = vcmask 261120
  %v112 = vsel %vm110, %v86, 0
  %114 = vmatprep.subr.bf16.mxu0 0
  %115 = vmatpush1.bf16.msra.mxu0 %v106
  %116 = vmatprep.subr.bf16.mxu0 0
  %117 = vmatpush1.bf16.msra.mxu0 %v107
  %118 = vmatprep.subr.bf16.mxu0 0
  %119 = vmatpush1.bf16.msra.mxu0 0
  %120 = vmatprep.subr.bf16.mxu0 0
  %121 = vmatpush1.bf16.msra.mxu0 0
  %122 = vmatprep.subr.bf16.mxu0 0
  %123 = vmatpush1.bf16.msra.mxu0 0
  %124 = vmatprep.subr.bf16.mxu0 0
  %125 = vmatpush1.bf16.msra.mxu0 0
  %126 = vmatprep.subr.bf16.mxu0 0
  %127 = vmatpush1.bf16.msra.mxu0 0
  %128 = vmatprep.subr.bf16.mxu0 0
  %129 = vmatpush1.bf16.msra.mxu0 0
  %130 = vmatprep.subr.bf16.mxu0 0
  %131 = vmatpush1.bf16.msra.mxu0 0
  %132 = vmatprep.subr.bf16.mxu0 0
  %133 = vmatpush1.bf16.msra.mxu0 0
  %134 = vmatprep.subr.bf16.mxu0 0
  %135 = vmatpush1.bf16.msra.mxu0 0
  %136 = vmatprep.subr.bf16.mxu0 0
  %137 = vmatpush1.bf16.msra.mxu0 0
  %138 = vmatprep.subr.bf16.mxu0 0
  %139 = vmatpush1.bf16.msra.mxu0 0
  %140 = vmatprep.subr.bf16.mxu0 0
  %141 = vmatpush1.bf16.msra.mxu0 0
  %142 = vmatprep.subr.bf16.mxu0 0
  %143 = vmatpush1.bf16.msra.mxu0 0
  %144 = vmatprep.subr.bf16.mxu0 0
  %145 = vmatpush1.bf16.msra.mxu0 0
  %146 = vmatprep.mubr.bf16.mxu0 0
  %147 = vmatmul.mubr.bf16.gmra.mrb[0].mxu0 %v112
  %v148 = vpop.f32.mrb[0].mxu0
  %v149 = vadd.f32 %v96, %v148
  %v150 = vpop.f32.mrb[0].mxu0
  %v151 = vpop.f32.mrb[0].mxu0
  %v152 = vpop.f32.mrb[0].mxu0
  %153 = vdwg.mxu0
  %v154 = vmax.f32 %v149, 0.0
  %v155 = vpack.c.bf16 %v154, %v154
  %v156 = vld [vmem:[%s5] sm:$0xf]
  %v157 = vld [vmem:[%s5 + $0x4] sm:$0xf]
  %v158 = vld [vmem:[%s5 + $0x8] sm:$0xf]
  %v159 = vld [vmem:[%s5 + $0xc] sm:$0xf]
  %v160 = vld [vmem:[%s6] sm:$0x1]
  %v162 = vlaneseq
  %v163 = vshrl.u32 %v162, 7
  %v164 = vsub.s32 0, %v163
  %v165 = vrot.slane %v160, %v164
  %v171 = vunpack.c.l.b16 %v156
  %v172 = vunpack.c.l.b16 %v157
  %v173 = vunpack.c.l.b16 %v158
  %v174 = vunpack.c.l.b16 %v159
  %v175 = vpack.c.b16 %v172, %v171
  %v176 = vpack.c.b16 %v174, %v173
  %v180 = vsel %vm110, %v155, 0
  %182 = vmatprep.subr.bf16.mxu0 0
  %183 = vmatpush1.bf16.msra.mxu0 %v175
  %184 = vmatprep.subr.bf16.mxu0 0
  %185 = vmatpush1.bf16.msra.mxu0 %v176
  %186 = vmatprep.subr.bf16.mxu0 0
  %187 = vmatpush1.bf16.msra.mxu0 0
  %188 = vmatprep.subr.bf16.mxu0 0
  %189 = vmatpush1.bf16.msra.mxu0 0
  %190 = vmatprep.subr.bf16.mxu0 0
  %191 = vmatpush1.bf16.msra.mxu0 0
  %192 = vmatprep.subr.bf16.mxu0 0
  %193 = vmatpush1.bf16.msra.mxu0 0
  %194 = vmatprep.subr.bf16.mxu0 0
  %195 = vmatpush1.bf16.msra.mxu0 0
  %196 = vmatprep.subr.bf16.mxu0 0
  %197 = vmatpush1.bf16.msra.mxu0 0
  %198 = vmatprep.subr.bf16.mxu0 0
  %199 = vmatpush1.bf16.msra.mxu0 0
  %200 = vmatprep.subr.bf16.mxu0 0
  %201 = vmatpush1.bf16.msra.mxu0 0
  %202 = vmatprep.subr.bf16.mxu0 0
  %203 = vmatpush1.bf16.msra.mxu0 0
  %204 = vmatprep.subr.bf16.mxu0 0
  %205 = vmatpush1.bf16.msra.mxu0 0
  %206 = vmatprep.subr.bf16.mxu0 0
  %207 = vmatpush1.bf16.msra.mxu0 0
  %208 = vmatprep.subr.bf16.mxu0 0
  %209 = vmatpush1.bf16.msra.mxu0 0
  %210 = vmatprep.subr.bf16.mxu0 0
  %211 = vmatpush1.bf16.msra.mxu0 0
  %212 = vmatprep.subr.bf16.mxu0 0
  %213 = vmatpush1.bf16.msra.mxu0 0
  %214 = vmatprep.mubr.bf16.mxu0 0
  %215 = vmatmul.mubr.bf16.gmra.mrb[0].mxu0 %v180
  %v216 = vpop.f32.mrb[0].mxu0
  %v217 = vadd.f32 %v165, %v216
  %v218 = vpop.f32.mrb[0].mxu0
  %v219 = vpop.f32.mrb[0].mxu0
  %v220 = vpop.f32.mrb[0].mxu0
  %221 = vdwg.mxu0
  %v222 = vtanh.pop %v217
  %vm223 = vcmask 31744
  %224 = vst.msk [vmem:[%s7] sm:$0xff] %vm223, %v222
  // Predicated region
  $region30: #{tpu_custom_call.1} parent=0 // pred_check
    _
  $region31: #{tpu_custom_call.1} parent=0 // pred_check_branch
    %226 = sbr.rel (0) target = $region33
  $region32: #{tpu_custom_call.1} parent=0 // pred_region
    _
  $region33: #{tpu_custom_call.1} parent=0 // pred_fallthru
    _
  // Predicated region
  $region34: #{tpu_custom_call.1} parent=0 // pred_check
    _
  $region35: #{tpu_custom_call.1} parent=0 // pred_check_branch
    %228 = sbr.rel (0) target = $region37
  $region36: #{tpu_custom_call.1} parent=0 // pred_region
    _
  $region37: #{tpu_custom_call.1} parent=0 // pred_fallthru
    _

</llo_original>
